<compile_context>
chip_gen: v6e
topology: v6e:2x2x1
jax: 0.10.0
libtpu: 0.0.40
codegen_flags: <defaults>
</compile_context>

<pallas_src>
import functools

import jax
import jax.numpy as jnp
from jax.experimental import pallas as pl
from jax.experimental.pallas import tpu as pltpu

_LANE = 128      # lane-dense fused-head width (action_dim + 1 real cols + padding)


def _round_up(x, m):
    return ((x + m - 1) // m) * m


def _actor_critic_kernel(x_ref, w1_ref, b1_ref, w23_ref, b23_ref, out_ref, *,
                         action_dim):
    compute_dtype = w1_ref.dtype  # bf16

    # ---- common: Linear(input_dim, 256) + ReLU (bf16 operands, f32 accum) ----
    x = x_ref[...].astype(compute_dtype)
    h = jnp.dot(x, w1_ref[...], preferred_element_type=jnp.float32)
    h = jnp.maximum(h + b1_ref[...], 0.0)                       # (TB, 256) f32

    # ---- fused actor+critic head: Linear(256, A+1) padded to 128 lanes ----
    y = jnp.dot(h.astype(w23_ref.dtype), w23_ref[...],
                preferred_element_type=jnp.float32)
    y = y + b23_ref[...]                                        # (TB, 128) f32

    # tanh only on action columns; value column (and padding) passes through.
    col = jax.lax.broadcasted_iota(jnp.int32, y.shape, dimension=1)
    y = jnp.where(col < action_dim, jnp.tanh(y), y)

    out_ref[...] = y.astype(out_ref.dtype)


def prepare_params(params, *, compute_dtype=jnp.bfloat16):
    """One-time weight preprocessing, hoisted out of the hot forward path.

    Fuses actor (W2, b2) + critic (W3, b3) into one lane-dense (256, 128) head
    and casts matmul operands to bf16 / biases to f32.
    """
    w2 = params["w2"]
    action_dim = w2.shape[1]
    assert action_dim + 1 <= _LANE, "fused head assumes action_dim + 1 <= 128"

    w23 = jnp.concatenate([w2, params["w3"]], axis=1)            # (256, A+1)
    b23 = jnp.concatenate([params["b2"], params["b3"]], axis=1)  # (1,  A+1)
    pad_n = _LANE - (action_dim + 1)
    w23 = jnp.pad(w23, ((0, 0), (0, pad_n)))
    b23 = jnp.pad(b23, ((0, 0), (0, pad_n)))

    return {
        "w1": params["w1"].astype(compute_dtype),    # (in, 256)  bf16
        "b1": params["b1"].astype(jnp.float32),      # (1, 256)   f32
        "w23": w23.astype(compute_dtype),            # (256, 128) bf16
        "b23": b23.astype(jnp.float32),              # (1, 128)   f32
    }


def actor_critic_forward(state, prepared, *, action_dim, block_b=1024,
                         out_dtype=jnp.bfloat16):
    """state (B, input_dim) f32 -> (actions (B, action_dim) f32, value (B, 1) f32)."""
    w1, b1 = prepared["w1"], prepared["b1"]
    w23, b23 = prepared["w23"], prepared["b23"]

    B, input_dim = state.shape
    hidden = w1.shape[1]

    if B <= 8:
        # Small-batch / inference path: full-array blocks (bypass the (8,128)
        # divisibility rule), no batch padding, single grid step.
        tb, b_pad, state_p = B, B, state
    else:
        # >= 2 grid steps so v7x's two TensorCores both get a "parallel" step;
        # tile capped at block_b (mem-bound sweet spot is ~512-1024 rows).
        tb = min(block_b, _round_up(-(-B // 2), 8))
        b_pad = _round_up(B, tb)
        state_p = jnp.pad(state, ((0, b_pad - B), (0, 0))) if b_pad != B else state
    grid = (b_pad // tb,)

    out_itemsize = jnp.dtype(out_dtype).itemsize
    cost = pl.CostEstimate(
        flops=2 * b_pad * (input_dim * hidden + hidden * _LANE),
        transcendentals=b_pad * _LANE,            # tanh evaluated on every lane
        bytes_accessed=(state_p.size * state_p.dtype.itemsize
                        + w1.size * w1.dtype.itemsize
                        + w23.size * w23.dtype.itemsize
                        + b1.size * 4 + b23.size * 4
                        + b_pad * _LANE * out_itemsize),
    )

    kernel = functools.partial(_actor_critic_kernel, action_dim=action_dim)

    # Note: pl.Buffered(1) on the constant weight/bias specs would shave their
    # unused second buffer (~70 KiB) -- negligible on every generation; omitted.
    out = pl.pallas_call(
        kernel,
        out_shape=jax.ShapeDtypeStruct((b_pad, _LANE), out_dtype),
        grid=grid,
        in_specs=[
            pl.BlockSpec((tb, input_dim), lambda i: (i, 0)),      # state tile
            pl.BlockSpec((input_dim, hidden), lambda i: (0, 0)),  # W1 (resident)
            pl.BlockSpec((1, hidden), lambda i: (0, 0)),          # b1
            pl.BlockSpec((hidden, _LANE), lambda i: (0, 0)),      # fused W23
            pl.BlockSpec((1, _LANE), lambda i: (0, 0)),           # fused b23
        ],
        out_specs=pl.BlockSpec((tb, _LANE), lambda i: (i, 0)),    # lane-dense slab
        compiler_params=pltpu.CompilerParams(
            dimension_semantics=("parallel",),
        ),
        cost_estimate=cost,
    )(state_p, w1, b1, w23, b23)

    actions = out[:B, :action_dim].astype(jnp.float32)
    value = out[:B, action_dim:action_dim + 1].astype(jnp.float32)
    return actions, value


def init_params(key, input_dim, action_dim):
    """Deterministic init mimicking torch.nn.Linear default U(-1/sqrt(fan_in), +)."""
    ks = jax.random.split(key, 6)

    def linear(kw, kb, fan_in, fan_out):
        bound = 1.0 / jnp.sqrt(fan_in)
        w = jax.random.uniform(kw, (fan_in, fan_out), jnp.float32, -bound, bound)
        b = jax.random.uniform(kb, (1, fan_out), jnp.float32, -bound, bound)
        return w, b

    w1, b1 = linear(ks[0], ks[1], input_dim, 256)
    w2, b2 = linear(ks[2], ks[3], 256, action_dim)
    w3, b3 = linear(ks[4], ks[5], 256, 1)
    return {"w1": w1, "b1": b1, "w2": w2, "b2": b2, "w3": w3, "b3": b3}


def reference_forward(state, p, compute_dtype=jnp.bfloat16):
    """Pure-JAX reference using the same bf16-operand / f32-accumulate path."""
    w1 = p["w1"].astype(compute_dtype)
    w2 = p["w2"].astype(compute_dtype)
    w3 = p["w3"].astype(compute_dtype)
    h = jnp.maximum(
        jnp.dot(state.astype(compute_dtype), w1,
                preferred_element_type=jnp.float32) + p["b1"], 0.0)
    hb = h.astype(compute_dtype)
    actions = jnp.tanh(
        jnp.dot(hb, w2, preferred_element_type=jnp.float32) + p["b2"])
    value = jnp.dot(hb, w3, preferred_element_type=jnp.float32) + p["b3"]
    return actions, value


if __name__ == "__main__":
    # LunarLander-v2: observation dim 8, action dim 4.
    INPUT_DIM, ACTION_DIM = 8, 4

    key = jax.random.PRNGKey(0)
    k_small, k_large, k_params = jax.random.split(key, 3)

    params = init_params(k_params, INPUT_DIM, ACTION_DIM)
    prepared = prepare_params(params)          # one-time, outside the hot path

    # --- small rollout batch (no-pad, single full-dim tile) ---
    state_s = jax.random.normal(k_small, (4, INPUT_DIM), jnp.float32)
    actions, value = jax.block_until_ready(
        actor_critic_forward(state_s, prepared, action_dim=ACTION_DIM))
    ref_a, ref_v = reference_forward(state_s, params)
    assert actions.shape == (4, ACTION_DIM) and value.shape == (4, 1)
    assert jnp.allclose(actions, ref_a, atol=1e-2, rtol=1e-2)
    assert jnp.allclose(value, ref_v, atol=1e-2, rtol=1e-2)

    # --- larger batch (tiled path, >=2 parallel grid steps for v7x) ---
    state_l = jax.random.normal(k_large, (300, INPUT_DIM), jnp.float32)
    actions_l, value_l = jax.block_until_ready(
        actor_critic_forward(state_l, prepared, action_dim=ACTION_DIM))
    ref_al, ref_vl = reference_forward(state_l, params)
    assert actions_l.shape == (300, ACTION_DIM) and value_l.shape == (300, 1)
    assert jnp.allclose(actions_l, ref_al, atol=1e-2, rtol=1e-2)
    assert jnp.allclose(value_l, ref_vl, atol=1e-2, rtol=1e-2)

    print("KERNEL_OK")
</pallas_src>

<mosaic_0001>
module attributes {stable_mosaic.version = 11 : i64} {
  func.func @_actor_critic_kernel(%arg0: i32, %arg1: memref<4x8xf32, #tpu.memory_space<vmem>>, %arg2: memref<8x256xbf16, #tpu.memory_space<vmem>>, %arg3: memref<1x256xf32, #tpu.memory_space<vmem>>, %arg4: memref<256x128xbf16, #tpu.memory_space<vmem>>, %arg5: memref<1x128xf32, #tpu.memory_space<vmem>>, %arg6: memref<4x128xbf16, #tpu.memory_space<vmem>>) attributes {dimension_semantics = [#tpu.dimension_semantics<parallel>], iteration_bounds = array<i64: 1>, scalar_prefetch = 0 : i64, scratch_operands = 0 : i64, tpu.core_type = #tpu.core_type<tc>, window_params = [{transform_indices = @transform_0, window_bounds = array<i64: 4, 8>}, {pipeline_mode = #tpu.pipeline_mode<synchronous>, transform_indices = @transform_1, window_bounds = array<i64: 8, 256>}, {pipeline_mode = #tpu.pipeline_mode<synchronous>, transform_indices = @transform_2, window_bounds = array<i64: 1, 256>}, {pipeline_mode = #tpu.pipeline_mode<synchronous>, transform_indices = @transform_3, window_bounds = array<i64: 256, 128>}, {pipeline_mode = #tpu.pipeline_mode<synchronous>, transform_indices = @transform_4, window_bounds = array<i64: 1, 128>}, {transform_indices = @transform_5, window_bounds = array<i64: 4, 128>}]} {
    %c0 = arith.constant 0 : index
    %c0_0 = arith.constant 0 : index
    %0 = vector.load %arg1[%c0, %c0_0] : memref<4x8xf32, #tpu.memory_space<vmem>>, vector<4x8xf32>
    %1 = arith.truncf %0 : vector<4x8xf32> to vector<4x8xbf16>
    %c0_1 = arith.constant 0 : index
    %c0_2 = arith.constant 0 : index
    %2 = vector.load %arg2[%c0_1, %c0_2] : memref<8x256xbf16, #tpu.memory_space<vmem>>, vector<8x256xbf16>
    %cst = arith.constant dense<0.000000e+00> : vector<4x256xf32>
    %3 = tpu.matmul %1, %2, %cst {dimension_numbers = #tpu.dot_dimension_numbers<[1], [0], [0], [1], [0, 0, 1, 1], [], []>} : vector<4x8xbf16>, vector<8x256xbf16>, vector<4x256xf32> -> vector<4x256xf32>
    %c0_3 = arith.constant 0 : index
    %c0_4 = arith.constant 0 : index
    %4 = vector.load %arg3[%c0_3, %c0_4] : memref<1x256xf32, #tpu.memory_space<vmem>>, vector<1x256xf32>
    %5 = vector.broadcast %4 : vector<1x256xf32> to vector<4x256xf32>
    %6 = arith.addf %3, %5 : vector<4x256xf32>
    %cst_5 = arith.constant 0.000000e+00 : f32
    %7 = vector.broadcast %cst_5 : f32 to vector<4x256xf32>
    %8 = arith.maximumf %6, %7 : vector<4x256xf32>
    %9 = arith.truncf %8 : vector<4x256xf32> to vector<4x256xbf16>
    %c0_6 = arith.constant 0 : index
    %c0_7 = arith.constant 0 : index
    %10 = vector.load %arg4[%c0_6, %c0_7] : memref<256x128xbf16, #tpu.memory_space<vmem>>, vector<256x128xbf16>
    %cst_8 = arith.constant dense<0.000000e+00> : vector<4x128xf32>
    %11 = tpu.matmul %9, %10, %cst_8 {dimension_numbers = #tpu.dot_dimension_numbers<[1], [0], [0], [1], [0, 0, 1, 1], [], []>} : vector<4x256xbf16>, vector<256x128xbf16>, vector<4x128xf32> -> vector<4x128xf32>
    %c0_9 = arith.constant 0 : index
    %c0_10 = arith.constant 0 : index
    %12 = vector.load %arg5[%c0_9, %c0_10] : memref<1x128xf32, #tpu.memory_space<vmem>>, vector<1x128xf32>
    %13 = vector.broadcast %12 : vector<1x128xf32> to vector<4x128xf32>
    %14 = arith.addf %11, %13 : vector<4x128xf32>
    %15 = tpu.iota {dimensions = array<i32: 1>} : vector<4x128xi32>
    %c4_i32 = arith.constant 4 : i32
    %16 = vector.broadcast %c4_i32 : i32 to vector<4x128xi32>
    %17 = arith.cmpi slt, %15, %16 : vector<4x128xi32>
    %18 = math.tanh %14 : vector<4x128xf32>
    %19 = arith.select %17, %18, %14 : vector<4x128xi1>, vector<4x128xf32>
    %20 = arith.truncf %19 : vector<4x128xf32> to vector<4x128xbf16>
    %c0_11 = arith.constant 0 : index
    %c0_12 = arith.constant 0 : index
    %21 = vector.load %arg6[%c0_11, %c0_12] : memref<4x128xbf16, #tpu.memory_space<vmem>>, vector<4x128xbf16>
    tpu.vector_store %arg6[%c0_11, %c0_12], %20 {strides = array<i32>} : memref<4x128xbf16, #tpu.memory_space<vmem>>, vector<4x128xbf16>,
    return
  }
  func.func @transform_0(%arg0: i32) -> (i32, i32) {
    %c0_i32 = arith.constant 0 : i32
    %c0_i32_0 = arith.constant 0 : i32
    return %arg0, %c0_i32 : i32, i32
  }
  func.func @transform_1(%arg0: i32) -> (i32, i32) {
    %c0_i32 = arith.constant 0 : i32
    %c0_i32_0 = arith.constant 0 : i32
    %c0_i32_1 = arith.constant 0 : i32
    return %c0_i32, %c0_i32_0 : i32, i32
  }
  func.func @transform_2(%arg0: i32) -> (i32, i32) {
    %c0_i32 = arith.constant 0 : i32
    %c0_i32_0 = arith.constant 0 : i32
    %c0_i32_1 = arith.constant 0 : i32
    return %c0_i32, %c0_i32_0 : i32, i32
  }
  func.func @transform_3(%arg0: i32) -> (i32, i32) {
    %c0_i32 = arith.constant 0 : i32
    %c0_i32_0 = arith.constant 0 : i32
    %c0_i32_1 = arith.constant 0 : i32
    return %c0_i32, %c0_i32_0 : i32, i32
  }
  func.func @transform_4(%arg0: i32) -> (i32, i32) {
    %c0_i32 = arith.constant 0 : i32
    %c0_i32_0 = arith.constant 0 : i32
    %c0_i32_1 = arith.constant 0 : i32
    return %c0_i32, %c0_i32_0 : i32, i32
  }
  func.func @transform_5(%arg0: i32) -> (i32, i32) {
    %c0_i32 = arith.constant 0 : i32
    %c0_i32_0 = arith.constant 0 : i32
    return %arg0, %c0_i32 : i32, i32
  }
}

</mosaic_0001>

<llo_original>
// kernel: tpu_custom_call.1
$region0: #{tpu_custom_call.1}
  #allocation0 [shape = 'u32[]', space=smem, size = 0x4, offset = 0x4, fixed_abs, tag = 'smem constant byte address 0x4 - core index']
  #allocation1 [shape = 'u32[144,128]{1,0:T(1,128)}', space=vmem, size = 0x12000, scoped, tag = 'internal scratch']
  %s0 = inlined_call_operand.hbm [shape: f32[4,8], index: 0, kind: input, shape index: {}]
  %s1 = inlined_call_operand.hbm [shape: bf16[8,256], index: 1, kind: input, shape index: {}]
  %s2 = inlined_call_operand.vmem [shape: f32[1,256], index: 2, kind: input, shape index: {}]
  %s3 = inlined_call_operand.hbm [shape: bf16[256,128], index: 3, kind: input, shape index: {}]
  %s4 = inlined_call_operand.vmem [shape: f32[1,128], index: 4, kind: input, shape index: {}]
  %s5 = inlined_call_operand.hbm [shape: bf16[4,128], index: 5, kind: output, shape index: {}]
  %s6 = sld [smem:[#allocation0]]
  $region42: #{tpu_custom_call.1} parent=0
    _
  %s8 = ssub.s32 1, %s6
  %s9 = scalar_select 0, %s8, %s6
  $region1: #{tpu_custom_call.1} parent=0
    #allocation2 [shape = 'u8[2048]{0}', space=vmem, size = 0x800, scoped, tag = 'input window, operand 0, single buffered']
    #allocation3 [shape = 's32[1]{0}', space=sflag, size = 0x4, scoped, tag = 'scoped memory for tpu_custom_call.1']
    #allocation4 [shape = 's32[1]{0}', space=sflag, size = 0x4, scoped, tag = 'scoped memory for tpu_custom_call.1']
    #allocation5 [shape = 'u8[4096]{0}', space=vmem, size = 0x1000, scoped, tag = 'input window, operand 1, single buffered']
    #allocation6 [shape = 's32[1]{0}', space=sflag, size = 0x4, scoped, tag = 'scoped memory for tpu_custom_call.1']
    #allocation7 [shape = 'u8[65536]{0}', space=vmem, size = 0x10000, scoped, tag = 'input window, operand 3, single buffered']
    #allocation8 [shape = 'u8[1024]{0}', space=vmem, size = 0x400, scoped, tag = 'output window, operand 0, single buffered']
    %10 = vsyncpa [#allocation3], 0
    %11 = vsyncpa [#allocation6], 0
    %12 = vsyncpa [#allocation4], 0
    // Predicated region
    $region2: #{tpu_custom_call.1} parent=1 // pred_check
      _
    $region3: #{tpu_custom_call.1} parent=1 // pred_check_branch
      %14 = sbr.rel (0) target = $region5
    $region4: #{tpu_custom_call.1} parent=1 // pred_region
      %s16 = ssub.s32 64, 64
      %17 = vsyncadd [#allocation3], %s16
      %s19 = sshll.u32 [#allocation2], 4
      %s20 = int_to_ptr.vmem [resolvable:$true] %s19
      %22 = dma.hbm_to_vmem [thread:$0]  %s0, 64, %s20, [#allocation3]
    $region5: #{tpu_custom_call.1} parent=1 // pred_fallthru
      _
    // Predicated region
    $region6: #{tpu_custom_call.1} parent=1 // pred_check
      _
    $region7: #{tpu_custom_call.1} parent=1 // pred_check_branch
      %24 = sbr.rel (0) target = $region9
    $region8: #{tpu_custom_call.1} parent=1 // pred_region
      %s26 = ssub.s32 128, 128
      %27 = vsyncadd [#allocation6], %s26
      %s29 = sshll.u32 [#allocation5], 4
      %s30 = int_to_ptr.vmem [resolvable:$true] %s29
      %32 = dma.hbm_to_vmem [thread:$0]  %s1, 128, %s30, [#allocation6]
    $region9: #{tpu_custom_call.1} parent=1 // pred_fallthru
      _
    // Predicated region
    $region10: #{tpu_custom_call.1} parent=1 // pred_check
      _
    $region11: #{tpu_custom_call.1} parent=1 // pred_check_branch
      %34 = sbr.rel (0) target = $region13
    $region12: #{tpu_custom_call.1} parent=1 // pred_region
      _
    $region13: #{tpu_custom_call.1} parent=1 // pred_fallthru
      _
    // Predicated region
    $region14: #{tpu_custom_call.1} parent=1 // pred_check
      _
    $region15: #{tpu_custom_call.1} parent=1 // pred_check_branch
      %36 = sbr.rel (0) target = $region17
    $region16: #{tpu_custom_call.1} parent=1 // pred_region
      %s38 = ssub.s32 2048, 2048
      %39 = vsyncadd [#allocation6], %s38
      %s40 = sshll.u32 [#allocation7], 4
      %s41 = int_to_ptr.vmem [resolvable:$true] %s40
      %46 = dma.hbm_to_vmem [thread:$0]  %s3, 2048, %s41, [#allocation6], 64, 64, 4
    $region17: #{tpu_custom_call.1} parent=1 // pred_fallthru
      _
    // Predicated region
    $region18: #{tpu_custom_call.1} parent=1 // pred_check
      _
    $region19: #{tpu_custom_call.1} parent=1 // pred_check_branch
      %48 = sbr.rel (0) target = $region21
    $region20: #{tpu_custom_call.1} parent=1 // pred_region
      _
    $region21: #{tpu_custom_call.1} parent=1 // pred_fallthru
      _
    // Predicated region
    $region22: #{tpu_custom_call.1} parent=1 // pred_check
      _
    $region23: #{tpu_custom_call.1} parent=1 // pred_check_branch
      %50 = sbr.rel (0) target = $region25
    $region24: #{tpu_custom_call.1} parent=1 // pred_region
      %51 = dma.done [#allocation3], 64
    $region25: #{tpu_custom_call.1} parent=1 // pred_fallthru
      _
    // Predicated region
    $region26: #{tpu_custom_call.1} parent=1 // pred_check
      _
    $region27: #{tpu_custom_call.1} parent=1 // pred_check_branch
      %53 = sbr.rel (0) target = $region29
    $region28: #{tpu_custom_call.1} parent=1 // pred_region
      %54 = dma.done [#allocation6], 128
    $region29: #{tpu_custom_call.1} parent=1 // pred_fallthru
      _
    // Predicated region
    $region30: #{tpu_custom_call.1} parent=1 // pred_check
      _
    $region31: #{tpu_custom_call.1} parent=1 // pred_check_branch
      %56 = sbr.rel (0) target = $region33
    $region32: #{tpu_custom_call.1} parent=1 // pred_region
      %57 = dma.done [#allocation6], 2048
    $region33: #{tpu_custom_call.1} parent=1 // pred_fallthru
      _
    %v59 = vld [vmem:[#allocation2] sm:$0xf]
    %v60 = vpack.c.bf16 %v59, %v59
    %v61 = vld [vmem:[#allocation5] sm:$0xff]
    %v62 = vld [vmem:[%s2] sm:$0x3]
    %v64 = vlaneseq
    %v65 = vshrl.u32 %v64, 7
    %v66 = vsub.s32 0, %v65
    %v67 = vrot.slane %v62, %v66
    %v68 = vlaneseq
    %v69 = vshrl.u32 %v68, 7
    %v70 = vsub.s32 1, %v69
    %v71 = vrot.slane %v62, %v70
    %v75 = vunpack.c.l.b16 %v61
    %v76 = vunpack.c.h.b16 %v61
    %v77 = vpack.c.b16 %v75, %v75
    %v78 = vpack.c.b16 %v76, %v76
    %vm79 = vcmask 64512
    %v81 = vsel %vm79, %v60, 0
    %vm83 = vcmask 1043456
    %v85 = vsel %vm83, %v77, 0
    %v88 = vsel %vm83, %v78, 0
    %90 = vmatprep.subr.bf16.mxu0 0
    %91 = vmatpush1.bf16.msra.mxu0 0
    %92 = vmatprep.subr.bf16.mxu0 0
    %93 = vmatpush1.bf16.msra.mxu0 0
    %94 = vmatprep.subr.bf16.mxu0 0
    %95 = vmatpush1.bf16.msra.mxu0 0
    %96 = vmatprep.subr.bf16.mxu0 0
    %97 = vmatpush1.bf16.msra.mxu0 0
    %98 = vmatprep.subr.bf16.mxu0 0
    %99 = vmatpush1.bf16.msra.mxu0 0
    %100 = vmatprep.subr.bf16.mxu0 0
    %101 = vmatpush1.bf16.msra.mxu0 0
    %102 = vmatprep.subr.bf16.mxu0 0
    %103 = vmatpush1.bf16.msra.mxu0 0
    %104 = vmatprep.subr.bf16.mxu0 %v88
    %105 = vmatpush1.bf16.msra.mxu0 %v85
    %106 = vmatprep.subr.bf16.mxu0 0
    %107 = vmatpush2.bf16.msra.mxu0 0
    %108 = vmatprep.subr.bf16.mxu0 0
    %109 = vmatpush2.bf16.msra.mxu0 0
    %110 = vmatprep.subr.bf16.mxu0 0
    %111 = vmatpush2.bf16.msra.mxu0 0
    %112 = vmatprep.subr.bf16.mxu0 0
    %113 = vmatpush2.bf16.msra.mxu0 0
    %114 = vmatprep.subr.bf16.mxu0 0
    %115 = vmatpush2.bf16.msra.mxu0 0
    %116 = vmatprep.subr.bf16.mxu0 0
    %117 = vmatpush2.bf16.msra.mxu0 0
    %118 = vmatprep.subr.bf16.mxu0 0
    %119 = vmatpush2.bf16.msra.mxu0 0
    %120 = vmatprep.subr.bf16.mxu0 0
    %121 = vmatpush2.bf16.msra.mxu0 0
    %122 = vmatprep.mubr.bf16.mxu0 0
    %123 = vmatmul.mubr.bf16.gmra.mxu0 %v81
    %v124 = vpop.f32.mrf.mxu0
    %v125 = vadd.f32 %v67, %v124
    %v126 = vpop.f32.mrf.mxu0
    %v127 = vadd.f32 %v71, %v126
    %v128 = vpop.f32.mrf.mxu0
    %v129 = vpop.f32.mrf.mxu0
    %130 = vdwg.mxu0
    %v131 = vmax.f32 %v125, 0.0
    %v132 = vmax.f32 %v127, 0.0
    %v133 = vpack.c.bf16 %v131, %v131
    %v134 = vpack.c.bf16 %v132, %v132
    %v135 = vld [vmem:[#allocation7] sm:$0xf]
    %v136 = vld [vmem:[#allocation7 + $0x4] sm:$0xf]
    %v137 = vld [vmem:[#allocation7 + $0x8] sm:$0xf]
    %v138 = vld [vmem:[#allocation7 + $0xc] sm:$0xf]
    %v139 = vld [vmem:[#allocation7 + $0x10] sm:$0xf]
    %v140 = vld [vmem:[#allocation7 + $0x14] sm:$0xf]
    %v141 = vld [vmem:[#allocation7 + $0x18] sm:$0xf]
    %v142 = vld [vmem:[#allocation7 + $0x1c] sm:$0xf]
    %v143 = vld [vmem:[#allocation7 + $0x20] sm:$0xf]
    %v144 = vld [vmem:[#allocation7 + $0x24] sm:$0xf]
    %v145 = vld [vmem:[#allocation7 + $0x28] sm:$0xf]
    %v146 = vld [vmem:[#allocation7 + $0x2c] sm:$0xf]
    %v147 = vld [vmem:[#allocation7 + $0x30] sm:$0xf]
    %v148 = vld [vmem:[#allocation7 + $0x34] sm:$0xf]
    %v149 = vld [vmem:[#allocation7 + $0x38] sm:$0xf]
    %v150 = vld [vmem:[#allocation7 + $0x3c] sm:$0xf]
    %v151 = vld [vmem:[#allocation7 + $0x40] sm:$0xf]
    %v152 = vld [vmem:[#allocation7 + $0x44] sm:$0xf]
    %v153 = vld [vmem:[#allocation7 + $0x48] sm:$0xf]
    %v154 = vld [vmem:[#allocation7 + $0x4c] sm:$0xf]
    %v155 = vld [vmem:[#allocation7 + $0x50] sm:$0xf]
    %v156 = vld [vmem:[#allocation7 + $0x54] sm:$0xf]
    %v157 = vld [vmem:[#allocation7 + $0x58] sm:$0xf]
    %v158 = vld [vmem:[#allocation7 + $0x5c] sm:$0xf]
    %v159 = vld [vmem:[#allocation7 + $0x60] sm:$0xf]
    %v160 = vld [vmem:[#allocation7 + $0x64] sm:$0xf]
    %v161 = vld [vmem:[#allocation7 + $0x68] sm:$0xf]
    %v162 = vld [vmem:[#allocation7 + $0x6c] sm:$0xf]
    %v163 = vld [vmem:[#allocation7 + $0x70] sm:$0xf]
    %v164 = vld [vmem:[#allocation7 + $0x74] sm:$0xf]
    %v165 = vld [vmem:[#allocation7 + $0x78] sm:$0xf]
    %v166 = vld [vmem:[#allocation7 + $0x7c] sm:$0xf]
    %v167 = vld [vmem:[%s4] sm:$0x1]
    %v169 = vlaneseq
    %v170 = vshrl.u32 %v169, 7
    %v171 = vsub.s32 0, %v170
    %v172 = vrot.slane %v167, %v171
    %v206 = vunpack.c.l.b16 %v135
    %v207 = vunpack.c.l.b16 %v136
    %v208 = vunpack.c.l.b16 %v137
    %v209 = vunpack.c.l.b16 %v138
    %v210 = vunpack.c.l.b16 %v139
    %v211 = vunpack.c.l.b16 %v140
    %v212 = vunpack.c.l.b16 %v141
    %v213 = vunpack.c.l.b16 %v142
    %v214 = vunpack.c.l.b16 %v143
    %v215 = vunpack.c.l.b16 %v144
    %v216 = vunpack.c.l.b16 %v145
    %v217 = vunpack.c.l.b16 %v146
    %v218 = vunpack.c.l.b16 %v147
    %v219 = vunpack.c.l.b16 %v148
    %v220 = vunpack.c.l.b16 %v149
    %v221 = vunpack.c.l.b16 %v150
    %v222 = vunpack.c.l.b16 %v151
    %v223 = vunpack.c.l.b16 %v152
    %v224 = vunpack.c.l.b16 %v153
    %v225 = vunpack.c.l.b16 %v154
    %v226 = vunpack.c.l.b16 %v155
    %v227 = vunpack.c.l.b16 %v156
    %v228 = vunpack.c.l.b16 %v157
    %v229 = vunpack.c.l.b16 %v158
    %v230 = vunpack.c.l.b16 %v159
    %v231 = vunpack.c.l.b16 %v160
    %v232 = vunpack.c.l.b16 %v161
    %v233 = vunpack.c.l.b16 %v162
    %v234 = vunpack.c.l.b16 %v163
    %v235 = vunpack.c.l.b16 %v164
    %v236 = vunpack.c.l.b16 %v165
    %v237 = vunpack.c.l.b16 %v166
    %v238 = vpack.c.b16 %v207, %v206
    %v239 = vpack.c.b16 %v209, %v208
    %v240 = vpack.c.b16 %v211, %v210
    %v241 = vpack.c.b16 %v213, %v212
    %v242 = vpack.c.b16 %v215, %v214
    %v243 = vpack.c.b16 %v217, %v216
    %v244 = vpack.c.b16 %v219, %v218
    %v245 = vpack.c.b16 %v221, %v220
    %v246 = vpack.c.b16 %v223, %v222
    %v247 = vpack.c.b16 %v225, %v224
    %v248 = vpack.c.b16 %v227, %v226
    %v249 = vpack.c.b16 %v229, %v228
    %v250 = vpack.c.b16 %v231, %v230
    %v251 = vpack.c.b16 %v233, %v232
    %v252 = vpack.c.b16 %v235, %v234
    %v253 = vpack.c.b16 %v237, %v236
    %270 = vmatprep.subr.bf16.mxu0 0
    %271 = vmatpush1.bf16.msra.mxu0 %v245
    %272 = vmatprep.subr.bf16.mxu0 0
    %273 = vmatpush1.bf16.msra.mxu0 %v244
    %274 = vmatprep.subr.bf16.mxu0 0
    %275 = vmatpush1.bf16.msra.mxu0 %v243
    %276 = vmatprep.subr.bf16.mxu0 0
    %277 = vmatpush1.bf16.msra.mxu0 %v242
    %278 = vmatprep.subr.bf16.mxu0 0
    %279 = vmatpush1.bf16.msra.mxu0 %v241
    %280 = vmatprep.subr.bf16.mxu0 0
    %281 = vmatpush1.bf16.msra.mxu0 %v240
    %282 = vmatprep.subr.bf16.mxu0 0
    %283 = vmatpush1.bf16.msra.mxu0 %v239
    %284 = vmatprep.subr.bf16.mxu0 0
    %285 = vmatpush1.bf16.msra.mxu0 %v238
    %286 = vmatprep.subr.bf16.mxu0 0
    %287 = vmatpush2.bf16.msra.mxu0 %v253
    %288 = vmatprep.subr.bf16.mxu0 0
    %289 = vmatpush2.bf16.msra.mxu0 %v252
    %290 = vmatprep.subr.bf16.mxu0 0
    %291 = vmatpush2.bf16.msra.mxu0 %v251
    %292 = vmatprep.subr.bf16.mxu0 0
    %293 = vmatpush2.bf16.msra.mxu0 %v250
    %294 = vmatprep.subr.bf16.mxu0 0
    %295 = vmatpush2.bf16.msra.mxu0 %v249
    %296 = vmatprep.subr.bf16.mxu0 0
    %297 = vmatpush2.bf16.msra.mxu0 %v248
    %298 = vmatprep.subr.bf16.mxu0 0
    %299 = vmatpush2.bf16.msra.mxu0 %v247
    %300 = vmatprep.subr.bf16.mxu0 0
    %301 = vmatpush2.bf16.msra.mxu0 %v246
    %302 = vmatprep.mubr.bf16.mxu0 %v134
    %303 = vmatmul.mubr.bf16.gmra.mxu0 %v133
    %v304 = vpop.f32.mrf.mxu0
    %v305 = vadd.f32 %v172, %v304
    %v306 = vpop.f32.mrf.mxu0
    %v307 = vpop.f32.mrf.mxu0
    %v308 = vpop.f32.mrf.mxu0
    %309 = vdwg.mxu0
    %v310 = vlaneseq
    %v311 = vand.u32 %v310, 127
    %vm312 = vcmp.lt.s32.totalorder %v311, 4
    %v313 = vtanh.pop %v305
    %v314 = vsel %vm312, %v313, %v305
    %v315 = vpack.c.bf16 %v314, %v314
    %316 = vst [vmem:[#allocation8] sm:$0x3] %v315
    // Predicated region
    $region34: #{tpu_custom_call.1} parent=1 // pred_check
      _
    $region35: #{tpu_custom_call.1} parent=1 // pred_check_branch
      %318 = sbr.rel (0) target = $region37
    $region36: #{tpu_custom_call.1} parent=1 // pred_region
      %s320 = ssub.s32 32, 32
      %321 = vsyncadd [#allocation4], %s320
      %s323 = sshll.u32 [#allocation8], 4
      %s324 = int_to_ptr.vmem [resolvable:$true] %s323
      %326 = dma.vmem_to_hbm [thread:$0]  %s324, 32, %s5, [#allocation4]
    $region37: #{tpu_custom_call.1} parent=1 // pred_fallthru
      _
    // Predicated region
    $region38: #{tpu_custom_call.1} parent=1 // pred_check
      _
    $region39: #{tpu_custom_call.1} parent=1 // pred_check_branch
      %328 = sbr.rel (0) target = $region41
    $region40: #{tpu_custom_call.1} parent=1 // pred_region
      %329 = dma.done [#allocation4], 32
    $region41: #{tpu_custom_call.1} parent=1 // pred_fallthru
      _
    %330 = vsyncpa [#allocation3], 1
    %331 = vsyncpa [#allocation6], 1
    %332 = vsyncpa [#allocation4], 1

</llo_original>
